<compile_context>
chip_gen: v5e
topology: v5e:2x2
jax: 0.10.0
libtpu: 0.0.40
codegen_flags: <defaults>
</compile_context>

<pallas_src>
import math
import functools

import jax
import jax.numpy as jnp
from jax.experimental import pallas as pl
from jax.experimental.pallas import tpu as pltpu


# ----------------------------- config ---------------------------------------
B = 2            # batch
S = 8            # sequence length
H = 32           # hidden_size
NH = 4           # num_attention_heads
HD = H // NH     # attention_head_size
LN_EPS = 1e-12   # layer_norm_eps (HF BERT default)
# TODO(synk): dropout omitted (eval-mode identity); attention_mask / head_mask /
#             cross-attention / past_key_value / relative position embeddings
#             not implemented (absolute embeddings, default call path).


# ----------------------------- kernel ---------------------------------------
def _bert_attention_kernel(x_ref, wqkv_ref, bqkv_ref, wo_ref, bo_ref,
                           gamma_ref, beta_ref, o_ref,
                           *, n_heads, head_dim, eps):
    seq = x_ref.shape[0]
    hidden = n_heads * head_dim

    x = x_ref[...]                                      # (S, H) native (MXU) dtype
    mxu_dtype = x.dtype

    # Fused QKV projection: ONE (S, H) @ (H, 3H) MXU matmul, f32 accumulation.
    # The 1/sqrt(head_dim) attention scale was folded into Wq / bq at prep time.
    qkv = (jnp.dot(x, wqkv_ref[...], preferred_element_type=jnp.float32)
           + bqkv_ref[...].astype(jnp.float32))                     # (S, 3H) f32

    def to_heads(t2):
        # (S, NH*HD) -> (NH, S, HD).  Pure layout plumbing: static lane slices,
        # a sublane-dim concat and a last-dim-preserving reshape.  No MXU work.
        cols = [t2[:, h * head_dim:(h + 1) * head_dim] for h in range(n_heads)]
        return jnp.concatenate(cols, axis=0).reshape(n_heads, seq, head_dim)

    q = to_heads(qkv[:, :hidden].astype(mxu_dtype))
    k = to_heads(qkv[:, hidden:2 * hidden].astype(mxu_dtype))
    v = to_heads(qkv[:, 2 * hidden:].astype(mxu_dtype))

    # Attention scores for ALL heads with one batched dot_general (batch = heads).
    s = jnp.einsum("hqd,hkd->hqk", q, k,
                   preferred_element_type=jnp.float32)              # (NH, S, S) f32

    # Numerically-stable softmax numerator in f32; normalization is deferred
    # until after PV (multiplies a (NH,S,HD) tensor instead of (NH,S,S)).
    s = s - jnp.max(s, axis=-1, keepdims=True)
    p = jnp.exp(s)
    denom = jnp.sum(p, axis=-1, keepdims=True)                      # (NH, S, 1) f32

    ctx = jnp.einsum("hqk,hkd->hqd", p.astype(mxu_dtype), v,
                     preferred_element_type=jnp.float32)            # (NH, S, HD) f32
    ctx = ctx * pl.reciprocal(denom, approx=True)                   # EUP slot

    # Reassemble heads -> (S, H) and run ONE output projection with K = H.
    ctx_sh = jnp.concatenate([ctx[h] for h in range(n_heads)], axis=1)   # (S, H) f32

    out = (jnp.dot(ctx_sh.astype(mxu_dtype), wo_ref[...],
                   preferred_element_type=jnp.float32)
           + bo_ref[...].astype(jnp.float32)
           + x.astype(jnp.float32))                                 # residual, f32

    # LayerNorm over the hidden dim (statistics in f32).
    mean = jnp.mean(out, axis=-1, keepdims=True)
    var = jnp.mean((out - mean) ** 2, axis=-1, keepdims=True)
    normed = (out - mean) * jax.lax.rsqrt(var + eps)
    y = (normed * gamma_ref[...].astype(jnp.float32)
         + beta_ref[...].astype(jnp.float32))
    # TODO(synk): at real BERT sizes H is a multiple of 128 so this store is
    #   lane-dense; at toy H=32 we keep the natural (S, H) layout (a cross-lane
    #   repack to (S*H/128, 128) would cost more than the masked store saves).
    o_ref[...] = y.astype(o_ref.dtype)


# ----------------------------- parameter prep --------------------------------
def prepare_bert_attention_params(params, n_heads):
    """ONE-TIME parameter preparation (do not call per forward):
    fuses Q/K/V weights and biases into a single (H, 3H) projection and folds
    the 1/sqrt(head_dim) attention scale into the Q slice."""
    h = params["wq"].shape[0]
    scale = 1.0 / math.sqrt(h // n_heads)
    return {
        "wqkv": jnp.concatenate(
            [params["wq"] * scale, params["wk"], params["wv"]], axis=1),  # (H, 3H)
        "bqkv": jnp.concatenate(
            [params["bq"] * scale, params["bk"], params["bv"]], axis=1),  # (1, 3H)
        "wo": params["wo"], "bo": params["bo"],
        "ln_gamma": params["ln_gamma"], "ln_beta": params["ln_beta"],
    }


# ----------------------------- wrapper ---------------------------------------
def bert_attention(hidden_states, prep, *, n_heads=NH, eps=LN_EPS):
    """hidden_states: (B, S, H).  prep: output of prepare_bert_attention_params."""
    b, s, h = hidden_states.shape
    head_dim = h // n_heads

    kernel = functools.partial(_bert_attention_kernel,
                               n_heads=n_heads, head_dim=head_dim, eps=eps)

    # Advisory cost estimate for XLA scheduling around the custom call.
    flops = (2 * b * s * h * 3 * h                      # fused QKV projection
             + 2 * 2 * b * n_heads * s * s * head_dim   # QK^T and PV
             + 2 * b * s * h * h)                       # output projection
    transcendentals = b * n_heads * s * s + b * n_heads * s + b * s
    itemsize = jnp.dtype(hidden_states.dtype).itemsize
    bytes_accessed = itemsize * (2 * b * s * h + h * 3 * h + 3 * h + h * h + 3 * h)

    # Grid over batch: each step runs one sequence's full attention; steps are
    # independent, so "parallel" lets v7x's two TensorCores split the batch.
    # Weights use a constant index_map -> fetched once and kept resident.
    # TODO(synk): at real BERT shapes (S=512, H=768, large B) tile rows (~256)
    #   and block K/V flash-style instead of materializing (NH, S, S) scores
    #   per step (v7x scoped VMEM is 32 MiB vs 128 MiB physical on v5e/v6e).
    grid_spec = pltpu.PrefetchScalarGridSpec(
        num_scalar_prefetch=0,
        grid=(b,),
        in_specs=[
            pl.BlockSpec((None, s, h), lambda i: (i, 0, 0)),    # x (one batch)
            pl.BlockSpec((h, 3 * h), lambda i: (0, 0)),         # wqkv (resident)
            pl.BlockSpec((1, 3 * h), lambda i: (0, 0)),         # bqkv
            pl.BlockSpec((h, h), lambda i: (0, 0)),             # wo
            pl.BlockSpec((1, h), lambda i: (0, 0)),             # bo
            pl.BlockSpec((1, h), lambda i: (0, 0)),             # ln_gamma
            pl.BlockSpec((1, h), lambda i: (0, 0)),             # ln_beta
        ],
        out_specs=pl.BlockSpec((None, s, h), lambda i: (i, 0, 0)),
    )

    return pl.pallas_call(
        kernel,
        out_shape=jax.ShapeDtypeStruct((b, s, h), hidden_states.dtype),
        grid_spec=grid_spec,
        compiler_params=pltpu.CompilerParams(
            dimension_semantics=("parallel",),
            vmem_limit_bytes=32 * 1024 * 1024),
        cost_estimate=pl.CostEstimate(flops=flops,
                                      transcendentals=transcendentals,
                                      bytes_accessed=bytes_accessed),
    )(hidden_states, prep["wqkv"], prep["bqkv"], prep["wo"], prep["bo"],
      prep["ln_gamma"], prep["ln_beta"])


# ----------------------------- reference (plain JAX) -------------------------
def bert_attention_ref(x, p):
    def lin(x_, w, b):
        return x_ @ w + b[0]
    q = lin(x, p["wq"], p["bq"]).reshape(B, S, NH, HD).transpose(0, 2, 1, 3)
    k = lin(x, p["wk"], p["bk"]).reshape(B, S, NH, HD).transpose(0, 2, 1, 3)
    v = lin(x, p["wv"], p["bv"]).reshape(B, S, NH, HD).transpose(0, 2, 1, 3)
    scores = jnp.einsum("bhqd,bhkd->bhqk", q, k) / math.sqrt(HD)
    probs = jax.nn.softmax(scores, axis=-1)
    ctx = jnp.einsum("bhqk,bhkd->bhqd", probs, v)
    ctx = ctx.transpose(0, 2, 1, 3).reshape(B, S, H)
    out = lin(ctx, p["wo"], p["bo"]) + x
    mean = out.mean(-1, keepdims=True)
    var = ((out - mean) ** 2).mean(-1, keepdims=True)
    return (out - mean) / jnp.sqrt(var + LN_EPS) * p["ln_gamma"][0] + p["ln_beta"][0]


# ----------------------------- main ------------------------------------------
if __name__ == "__main__":
    key = jax.random.PRNGKey(0)
    keys = jax.random.split(key, 12)

    def init_w(k, shape, scale=0.02):
        return (scale * jax.random.normal(k, shape)).astype(jnp.float32)

    params = {
        "wq": init_w(keys[0], (H, H)), "bq": init_w(keys[1], (1, H)),
        "wk": init_w(keys[2], (H, H)), "bk": init_w(keys[3], (1, H)),
        "wv": init_w(keys[4], (H, H)), "bv": init_w(keys[5], (1, H)),
        "wo": init_w(keys[6], (H, H)), "bo": init_w(keys[7], (1, H)),
        "ln_gamma": jnp.ones((1, H), jnp.float32),
        "ln_beta": jnp.zeros((1, H), jnp.float32),
    }

    hidden_states = jax.random.normal(keys[8], (B, S, H), dtype=jnp.float32)

    # One-time parameter preparation (not per-call).
    prep = prepare_bert_attention_params(params, NH)
    prep = jax.tree_util.tree_map(jax.block_until_ready, prep)

    out = bert_attention(hidden_states, prep)
    out = jax.block_until_ready(out)

    ref = bert_attention_ref(hidden_states, params)
    assert out.shape == (B, S, H)
    assert jnp.allclose(out, ref, atol=2e-4, rtol=2e-4), "mismatch vs JAX reference"

    print("KERNEL_OK")
</pallas_src>

<mosaic_0001>
module attributes {stable_mosaic.version = 11 : i64} {
  func.func @_bert_attention_kernel(%arg0: i32, %arg1: memref<1x8x32xf32, #tpu.memory_space<vmem>>, %arg2: memref<32x96xf32, #tpu.memory_space<vmem>>, %arg3: memref<1x96xf32, #tpu.memory_space<vmem>>, %arg4: memref<32x32xf32, #tpu.memory_space<vmem>>, %arg5: memref<1x32xf32, #tpu.memory_space<vmem>>, %arg6: memref<1x32xf32, #tpu.memory_space<vmem>>, %arg7: memref<1x32xf32, #tpu.memory_space<vmem>>, %arg8: memref<1x8x32xf32, #tpu.memory_space<vmem>>) attributes {dimension_semantics = [#tpu.dimension_semantics<parallel>], iteration_bounds = array<i64: 2>, scalar_prefetch = 0 : i64, scratch_operands = 0 : i64, tpu.core_type = #tpu.core_type<tc>, window_params = [{transform_indices = @transform_0, window_bounds = array<i64: 1, 8, 32>}, {pipeline_mode = #tpu.pipeline_mode<synchronous>, transform_indices = @transform_1, window_bounds = array<i64: 32, 96>}, {pipeline_mode = #tpu.pipeline_mode<synchronous>, transform_indices = @transform_2, window_bounds = array<i64: 1, 96>}, {pipeline_mode = #tpu.pipeline_mode<synchronous>, transform_indices = @transform_3, window_bounds = array<i64: 32, 32>}, {pipeline_mode = #tpu.pipeline_mode<synchronous>, transform_indices = @transform_4, window_bounds = array<i64: 1, 32>}, {pipeline_mode = #tpu.pipeline_mode<synchronous>, transform_indices = @transform_5, window_bounds = array<i64: 1, 32>}, {pipeline_mode = #tpu.pipeline_mode<synchronous>, transform_indices = @transform_6, window_bounds = array<i64: 1, 32>}, {transform_indices = @transform_7, window_bounds = array<i64: 1, 8, 32>}]} {
    %c0 = arith.constant 0 : index
    %c0_0 = arith.constant 0 : index
    %c0_1 = arith.constant 0 : index
    %0 = vector.load %arg1[%c0, %c0_0, %c0_1] : memref<1x8x32xf32, #tpu.memory_space<vmem>>, vector<1x8x32xf32>
    %1 = vector.shape_cast %0 : vector<1x8x32xf32> to vector<8x32xf32>
    %c0_2 = arith.constant 0 : index
    %c0_3 = arith.constant 0 : index
    %2 = vector.load %arg2[%c0_2, %c0_3] : memref<32x96xf32, #tpu.memory_space<vmem>>, vector<32x96xf32>
    %cst = arith.constant dense<0.000000e+00> : vector<8x96xf32>
    %3 = tpu.matmul %1, %2, %cst {dimension_numbers = #tpu.dot_dimension_numbers<[1], [0], [0], [1], [0, 0, 1, 1], [], []>} : vector<8x32xf32>, vector<32x96xf32>, vector<8x96xf32> -> vector<8x96xf32>
    %c0_4 = arith.constant 0 : index
    %c0_5 = arith.constant 0 : index
    %4 = vector.load %arg3[%c0_4, %c0_5] : memref<1x96xf32, #tpu.memory_space<vmem>>, vector<1x96xf32>
    %5 = vector.broadcast %4 : vector<1x96xf32> to vector<8x96xf32>
    %6 = arith.addf %3, %5 : vector<8x96xf32>
    %7 = vector.extract_strided_slice %6 {offsets = [0, 0], sizes = [8, 32], strides = [1, 1]} : vector<8x96xf32> to vector<8x32xf32>
    %8 = vector.extract_strided_slice %7 {offsets = [0, 0], sizes = [8, 8], strides = [1, 1]} : vector<8x32xf32> to vector<8x8xf32>
    %9 = vector.extract_strided_slice %7 {offsets = [0, 8], sizes = [8, 8], strides = [1, 1]} : vector<8x32xf32> to vector<8x8xf32>
    %10 = vector.extract_strided_slice %7 {offsets = [0, 16], sizes = [8, 8], strides = [1, 1]} : vector<8x32xf32> to vector<8x8xf32>
    %11 = vector.extract_strided_slice %7 {offsets = [0, 24], sizes = [8, 8], strides = [1, 1]} : vector<8x32xf32> to vector<8x8xf32>
    %12 = tpu.concatenate %8, %9, %10, %11 in 0 : vector<8x8xf32>, vector<8x8xf32>, vector<8x8xf32>, vector<8x8xf32> -> vector<32x8xf32>
    %13 = vector.shape_cast %12 : vector<32x8xf32> to vector<4x8x8xf32>
    %14 = vector.extract_strided_slice %6 {offsets = [0, 32], sizes = [8, 32], strides = [1, 1]} : vector<8x96xf32> to vector<8x32xf32>
    %15 = vector.extract_strided_slice %14 {offsets = [0, 0], sizes = [8, 8], strides = [1, 1]} : vector<8x32xf32> to vector<8x8xf32>
    %16 = vector.extract_strided_slice %14 {offsets = [0, 8], sizes = [8, 8], strides = [1, 1]} : vector<8x32xf32> to vector<8x8xf32>
    %17 = vector.extract_strided_slice %14 {offsets = [0, 16], sizes = [8, 8], strides = [1, 1]} : vector<8x32xf32> to vector<8x8xf32>
    %18 = vector.extract_strided_slice %14 {offsets = [0, 24], sizes = [8, 8], strides = [1, 1]} : vector<8x32xf32> to vector<8x8xf32>
    %19 = tpu.concatenate %15, %16, %17, %18 in 0 : vector<8x8xf32>, vector<8x8xf32>, vector<8x8xf32>, vector<8x8xf32> -> vector<32x8xf32>
    %20 = vector.shape_cast %19 : vector<32x8xf32> to vector<4x8x8xf32>
    %21 = vector.extract_strided_slice %6 {offsets = [0, 64], sizes = [8, 32], strides = [1, 1]} : vector<8x96xf32> to vector<8x32xf32>
    %22 = vector.extract_strided_slice %21 {offsets = [0, 0], sizes = [8, 8], strides = [1, 1]} : vector<8x32xf32> to vector<8x8xf32>
    %23 = vector.extract_strided_slice %21 {offsets = [0, 8], sizes = [8, 8], strides = [1, 1]} : vector<8x32xf32> to vector<8x8xf32>
    %24 = vector.extract_strided_slice %21 {offsets = [0, 16], sizes = [8, 8], strides = [1, 1]} : vector<8x32xf32> to vector<8x8xf32>
    %25 = vector.extract_strided_slice %21 {offsets = [0, 24], sizes = [8, 8], strides = [1, 1]} : vector<8x32xf32> to vector<8x8xf32>
    %26 = tpu.concatenate %22, %23, %24, %25 in 0 : vector<8x8xf32>, vector<8x8xf32>, vector<8x8xf32>, vector<8x8xf32> -> vector<32x8xf32>
    %27 = vector.shape_cast %26 : vector<32x8xf32> to vector<4x8x8xf32>
    "tpu.trace_start"() <{level = 10 : i32, message = "hqd,hkd->hqk"}> : () -> ()
    %cst_6 = arith.constant dense<0.000000e+00> : vector<4x8x8xf32>
    %28 = tpu.matmul %13, %20, %cst_6 {dimension_numbers = #tpu.dot_dimension_numbers<[2], [2], [1], [1], [0, 0, 0, 1, 1, 1], [0], [0]>} : vector<4x8x8xf32>, vector<4x8x8xf32>, vector<4x8x8xf32> -> vector<4x8x8xf32>
    "tpu.trace_stop"() : () -> ()
    %cst_7 = arith.constant dense<0xFF800000> : vector<4x8xf32>
    %29 = vector.multi_reduction <maximumf>, %28, %cst_7 [2] : vector<4x8x8xf32> to vector<4x8xf32>
    %30 = vector.shape_cast %29 : vector<4x8xf32> to vector<4x8x1xf32>
    %31 = vector.broadcast %30 : vector<4x8x1xf32> to vector<4x8x8xf32>
    %32 = arith.subf %28, %31 : vector<4x8x8xf32>
    %33 = math.exp %32 : vector<4x8x8xf32>
    %cst_8 = arith.constant dense<0.000000e+00> : vector<4x8xf32>
    %34 = vector.multi_reduction <add>, %33, %cst_8 [2] : vector<4x8x8xf32> to vector<4x8xf32>
    %35 = vector.shape_cast %34 : vector<4x8xf32> to vector<4x8x1xf32>
    "tpu.trace_start"() <{level = 10 : i32, message = "hqk,hkd->hqd"}> : () -> ()
    %cst_9 = arith.constant dense<0.000000e+00> : vector<4x8x8xf32>
    %36 = tpu.matmul %33, %27, %cst_9 {dimension_numbers = #tpu.dot_dimension_numbers<[2], [1], [1], [2], [0, 0, 0, 1, 1, 2], [0], [0]>} : vector<4x8x8xf32>, vector<4x8x8xf32>, vector<4x8x8xf32> -> vector<4x8x8xf32>
    "tpu.trace_stop"() : () -> ()
    %37 = tpu.reciprocal %35 {approx = true} : vector<4x8x1xf32> -> vector<4x8x1xf32>
    %38 = vector.broadcast %37 : vector<4x8x1xf32> to vector<4x8x8xf32>
    %39 = arith.mulf %36, %38 : vector<4x8x8xf32>
    %40 = vector.extract_strided_slice %39 {offsets = [0, 0, 0], sizes = [1, 8, 8], strides = [1, 1, 1]} : vector<4x8x8xf32> to vector<1x8x8xf32>
    %41 = vector.shape_cast %40 : vector<1x8x8xf32> to vector<8x8xf32>
    %42 = vector.extract_strided_slice %39 {offsets = [1, 0, 0], sizes = [1, 8, 8], strides = [1, 1, 1]} : vector<4x8x8xf32> to vector<1x8x8xf32>
    %43 = vector.shape_cast %42 : vector<1x8x8xf32> to vector<8x8xf32>
    %44 = vector.extract_strided_slice %39 {offsets = [2, 0, 0], sizes = [1, 8, 8], strides = [1, 1, 1]} : vector<4x8x8xf32> to vector<1x8x8xf32>
    %45 = vector.shape_cast %44 : vector<1x8x8xf32> to vector<8x8xf32>
    %46 = vector.extract_strided_slice %39 {offsets = [3, 0, 0], sizes = [1, 8, 8], strides = [1, 1, 1]} : vector<4x8x8xf32> to vector<1x8x8xf32>
    %47 = vector.shape_cast %46 : vector<1x8x8xf32> to vector<8x8xf32>
    %48 = tpu.concatenate %41, %43, %45, %47 in 1 : vector<8x8xf32>, vector<8x8xf32>, vector<8x8xf32>, vector<8x8xf32> -> vector<8x32xf32>
    %c0_10 = arith.constant 0 : index
    %c0_11 = arith.constant 0 : index
    %49 = vector.load %arg4[%c0_10, %c0_11] : memref<32x32xf32, #tpu.memory_space<vmem>>, vector<32x32xf32>
    %cst_12 = arith.constant dense<0.000000e+00> : vector<8x32xf32>
    %50 = tpu.matmul %48, %49, %cst_12 {dimension_numbers = #tpu.dot_dimension_numbers<[1], [0], [0], [1], [0, 0, 1, 1], [], []>} : vector<8x32xf32>, vector<32x32xf32>, vector<8x32xf32> -> vector<8x32xf32>
    %c0_13 = arith.constant 0 : index
    %c0_14 = arith.constant 0 : index
    %51 = vector.load %arg5[%c0_13, %c0_14] : memref<1x32xf32, #tpu.memory_space<vmem>>, vector<1x32xf32>
    %52 = vector.broadcast %51 : vector<1x32xf32> to vector<8x32xf32>
    %53 = arith.addf %50, %52 : vector<8x32xf32>
    %54 = arith.addf %53, %1 : vector<8x32xf32>
    %cst_15 = arith.constant dense<0.000000e+00> : vector<8xf32>
    %55 = vector.multi_reduction <add>, %54, %cst_15 [1] : vector<8x32xf32> to vector<8xf32>
    %56 = vector.shape_cast %55 : vector<8xf32> to vector<8x1xf32>
    %cst_16 = arith.constant 3.200000e+01 : f32
    %57 = vector.broadcast %cst_16 : f32 to vector<8x1xf32>
    %58 = arith.divf %56, %57 : vector<8x1xf32>
    %59 = vector.broadcast %58 : vector<8x1xf32> to vector<8x32xf32>
    %60 = arith.subf %54, %59 : vector<8x32xf32>
    %61 = arith.mulf %60, %60 : vector<8x32xf32>
    %cst_17 = arith.constant dense<0.000000e+00> : vector<8xf32>
    %62 = vector.multi_reduction <add>, %61, %cst_17 [1] : vector<8x32xf32> to vector<8xf32>
    %63 = vector.shape_cast %62 : vector<8xf32> to vector<8x1xf32>
    %cst_18 = arith.constant 3.200000e+01 : f32
    %64 = vector.broadcast %cst_18 : f32 to vector<8x1xf32>
    %65 = arith.divf %63, %64 : vector<8x1xf32>
    %66 = vector.broadcast %58 : vector<8x1xf32> to vector<8x32xf32>
    %67 = arith.subf %54, %66 : vector<8x32xf32>
    %cst_19 = arith.constant 9.99999996E-13 : f32
    %68 = vector.broadcast %cst_19 : f32 to vector<8x1xf32>
    %69 = arith.addf %65, %68 : vector<8x1xf32>
    %70 = math.rsqrt %69 : vector<8x1xf32>
    %71 = vector.broadcast %70 : vector<8x1xf32> to vector<8x32xf32>
    %72 = arith.mulf %67, %71 : vector<8x32xf32>
    %c0_20 = arith.constant 0 : index
    %c0_21 = arith.constant 0 : index
    %73 = vector.load %arg6[%c0_20, %c0_21] : memref<1x32xf32, #tpu.memory_space<vmem>>, vector<1x32xf32>
    %74 = vector.broadcast %73 : vector<1x32xf32> to vector<8x32xf32>
    %75 = arith.mulf %72, %74 : vector<8x32xf32>
    %c0_22 = arith.constant 0 : index
    %c0_23 = arith.constant 0 : index
    %76 = vector.load %arg7[%c0_22, %c0_23] : memref<1x32xf32, #tpu.memory_space<vmem>>, vector<1x32xf32>
    %77 = vector.broadcast %76 : vector<1x32xf32> to vector<8x32xf32>
    %78 = arith.addf %75, %77 : vector<8x32xf32>
    %c0_24 = arith.constant 0 : index
    %c0_25 = arith.constant 0 : index
    %c0_26 = arith.constant 0 : index
    %79 = vector.load %arg8[%c0_24, %c0_25, %c0_26] : memref<1x8x32xf32, #tpu.memory_space<vmem>>, vector<1x8x32xf32>
    %80 = vector.shape_cast %79 : vector<1x8x32xf32> to vector<8x32xf32>
    %81 = vector.shape_cast %78 : vector<8x32xf32> to vector<1x8x32xf32>
    tpu.vector_store %arg8[%c0_24, %c0_25, %c0_26], %81 {strides = array<i32>} : memref<1x8x32xf32, #tpu.memory_space<vmem>>, vector<1x8x32xf32>,
    return
  }
  func.func @transform_0(%arg0: i32) -> (i32, i32, i32) {
    %c0_i32 = arith.constant 0 : i32
    %c0_i32_0 = arith.constant 0 : i32
    %c0_i32_1 = arith.constant 0 : i32
    return %arg0, %c0_i32, %c0_i32_0 : i32, i32, i32
  }
  func.func @transform_1(%arg0: i32) -> (i32, i32) {
    %c0_i32 = arith.constant 0 : i32
    %c0_i32_0 = arith.constant 0 : i32
    %c0_i32_1 = arith.constant 0 : i32
    return %c0_i32, %c0_i32_0 : i32, i32
  }
  func.func @transform_2(%arg0: i32) -> (i32, i32) {
    %c0_i32 = arith.constant 0 : i32
    %c0_i32_0 = arith.constant 0 : i32
    %c0_i32_1 = arith.constant 0 : i32
    return %c0_i32, %c0_i32_0 : i32, i32
  }
  func.func @transform_3(%arg0: i32) -> (i32, i32) {
    %c0_i32 = arith.constant 0 : i32
    %c0_i32_0 = arith.constant 0 : i32
    %c0_i32_1 = arith.constant 0 : i32
    return %c0_i32, %c0_i32_0 : i32, i32
  }
  func.func @transform_4(%arg0: i32) -> (i32, i32) {
    %c0_i32 = arith.constant 0 : i32
    %c0_i32_0 = arith.constant 0 : i32
    %c0_i32_1 = arith.constant 0 : i32
    return %c0_i32, %c0_i32_0 : i32, i32
  }
  func.func @transform_5(%arg0: i32) -> (i32, i32) {
    %c0_i32 = arith.constant 0 : i32
    %c0_i32_0 = arith.constant 0 : i32
    %c0_i32_1 = arith.constant 0 : i32
    return %c0_i32, %c0_i32_0 : i32, i32
  }
  func.func @transform_6(%arg0: i32) -> (i32, i32) {
    %c0_i32 = arith.constant 0 : i32
    %c0_i32_0 = arith.constant 0 : i32
    %c0_i32_1 = arith.constant 0 : i32
    return %c0_i32, %c0_i32_0 : i32, i32
  }
  func.func @transform_7(%arg0: i32) -> (i32, i32, i32) {
    %c0_i32 = arith.constant 0 : i32
    %c0_i32_0 = arith.constant 0 : i32
    %c0_i32_1 = arith.constant 0 : i32
    return %arg0, %c0_i32, %c0_i32_0 : i32, i32, i32
  }
}

</mosaic_0001>

<llo_original>
// kernel: tpu_custom_call.1
$region0: #{tpu_custom_call.1}
  #allocation0 [shape = 'u32[]', space=smem, size = 0x4, offset = 0x4, fixed_abs, tag = 'smem constant byte address 0x4 - core index']
  #allocation1 [shape = 'u32[72,128]{1,0:T(1,128)}', space=vmem, size = 0x9000, scoped, tag = 'internal scratch']
  %s0 = inlined_call_operand.hbm [shape: f32[2,8,32], index: 0, kind: input, shape index: {}]
  %s1 = inlined_call_operand.hbm [shape: f32[32,96], index: 1, kind: input, shape index: {}]
  %s2 = inlined_call_operand.vmem [shape: f32[1,96], index: 2, kind: input, shape index: {}]
  %s3 = inlined_call_operand.hbm [shape: f32[32,32], index: 3, kind: input, shape index: {}]
  %s4 = inlined_call_operand.vmem [shape: f32[1,32], index: 4, kind: input, shape index: {}]
  %s5 = inlined_call_operand.vmem [shape: f32[1,32], index: 5, kind: input, shape index: {}]
  %s6 = inlined_call_operand.vmem [shape: f32[1,32], index: 6, kind: input, shape index: {}]
  %s7 = inlined_call_operand.hbm [shape: f32[2,8,32], index: 7, kind: output, shape index: {}]
  %s8 = sld [smem:[#allocation0]]
  $region73: #{tpu_custom_call.1} parent=0
    _
  %s10 = ssub.s32 1, %s8
  %s11 = scalar_select 0, %s10, %s8
  $region1: #{tpu_custom_call.1} parent=0
    #allocation2 [shape = 'u8[8192]{0}', space=vmem, size = 0x2000, scoped, tag = 'input window, operand 0']
    #allocation3 [shape = 's32[2]{0}', space=sflag, size = 0x8, scoped, tag = 'scoped memory for tpu_custom_call.1']
    #allocation4 [shape = 's32[2]{0}', space=sflag, size = 0x8, scoped, tag = 'scoped memory for tpu_custom_call.1']
    #allocation5 [shape = 'u8[16384]{0}', space=vmem, size = 0x4000, scoped, tag = 'input window, operand 1, single buffered']
    #allocation6 [shape = 's32[1]{0}', space=sflag, size = 0x4, scoped, tag = 'scoped memory for tpu_custom_call.1']
    #allocation7 [shape = 'u8[16384]{0}', space=vmem, size = 0x4000, scoped, tag = 'input window, operand 3, single buffered']
    #allocation8 [shape = 'u8[8192]{0}', space=vmem, size = 0x2000, scoped, tag = 'output window, operand 0']
    %12 = vsyncpa [#allocation3], 0
    %s13 = scalar_lea.sflag [#allocation3], 1
    %14 = vsyncpa %s13, 0
    %15 = vsyncpa [#allocation6], 0
    %16 = vsyncpa [#allocation4], 0
    %s17 = scalar_lea.sflag [#allocation4], 1
    %18 = vsyncpa %s17, 0
    loop: start=0, step=1, limit=4
    $region2: #{tpu_custom_call.1} parent=1 // loop_pre_header
      _
    $region3: #{tpu_custom_call.1} parent=1 // loop_header
      %s20 = sphi 0, %s24
      %p21 = scmp.ge.s32.totalorder %s20, 4
      %s30 = sphi 0, %s32
      %s33 = sphi 0, %s30
      %s34 = sphi 0, %s33
      %s50 = sphi 0, %s34
      %s54 = sphi 0, %s54
      %s56 = sphi 0, %s54
      %s57 = sphi 0, %s56
      %s71 = sphi 0, %s57
      %s75 = sphi 0, %s75
      %s77 = sphi 0, %s75
      %s78 = sphi 0, %s77
      %s92 = sphi 0, %s78
      %s96 = sphi 0, %s96
      %s98 = sphi 0, %s96
      %s99 = sphi 0, %s98
      %s113 = sphi 0, %s99
      %s117 = sphi 0, %s117
      %s119 = sphi 0, %s117
      %s120 = sphi 0, %s119
      %s134 = sphi 0, %s120
      %s138 = sphi 0, %s138
      %s140 = sphi 0, %s138
      %s141 = sphi 0, %s140
      %s155 = sphi 0, %s141
      %s159 = sphi 0, %s159
      %s161 = sphi 0, %s159
      %s162 = sphi 0, %s161
      %s176 = sphi 0, %s162
      %s182 = sphi 0, %s184
      %s185 = sphi 0, %s182
      %s186 = sphi 0, %s185
      %s202 = sphi 0, %s186
    $region4: #{tpu_custom_call.1} parent=1 // loop_header_branch
      %23 = sbr.rel (%p21) target = $region8
    $region5: #{tpu_custom_call.1} parent=1 // loop_body
      %s25 = ssub.s32 %s20, 1
      %s26 = ssub.s32 %s20, 2
      %s27 = sadd.s32 %s20, 1
      %s28 = ssub.s32 %s20, %s27
      %p29 = scmp.eq.s32.totalorder %s28, 0
      %s31 = sadd.s32 %s30, 1
      %s32 = scalar_select %p29, %s30, %s31
      %p35 = pneg %p29
      %p36 = scmp.eq.s32.totalorder %s20, 1
      %p37 = por %p35, %p36
      %p38 = scmp.ne.s32.totalorder %s30, %s33
      %p39 = scmp.eq.s32.totalorder %s20, 0
      %p40 = por %p38, %p39
      %p41 = scmp.ne.s32.totalorder %s30, %s33
      %p42 = scmp.eq.s32.totalorder %s25, 1
      %p43 = por %p41, %p42
      %p44 = scmp.ne.s32.totalorder %s33, %s34
      %p45 = scmp.eq.s32.totalorder %s25, 0
      %p46 = por %p44, %p45
      %p47 = scmp.ne.s32.totalorder %s33, %s34
      %p48 = scmp.eq.s32.totalorder %s26, 1
      %p49 = por %p47, %p48
      %p51 = scmp.ne.s32.totalorder %s34, %s50
      %p52 = scmp.eq.s32.totalorder %s26, 0
      %p53 = por %p51, %p52
      %s55 = sadd.s32 %s54, 1
      %p58 = scmp.eq.s32.totalorder %s20, 1
      %p59 = scmp.ne.s32.totalorder %s54, %s56
      %p60 = scmp.eq.s32.totalorder %s20, 0
      %p61 = por %p59, %p60
      %p62 = scmp.ne.s32.totalorder %s54, %s56
      %p63 = scmp.eq.s32.totalorder %s25, 1
      %p64 = por %p62, %p63
      %p65 = scmp.ne.s32.totalorder %s56, %s57
      %p66 = scmp.eq.s32.totalorder %s25, 0
      %p67 = por %p65, %p66
      %p68 = scmp.ne.s32.totalorder %s56, %s57
      %p69 = scmp.eq.s32.totalorder %s26, 1
      %p70 = por %p68, %p69
      %p72 = scmp.ne.s32.totalorder %s57, %s71
      %p73 = scmp.eq.s32.totalorder %s26, 0
      %p74 = por %p72, %p73
      %s76 = sadd.s32 %s75, 1
      %p79 = scmp.eq.s32.totalorder %s20, 1
      %p80 = scmp.ne.s32.totalorder %s75, %s77
      %p81 = scmp.eq.s32.totalorder %s20, 0
      %p82 = por %p80, %p81
      %p83 = scmp.ne.s32.totalorder %s75, %s77
      %p84 = scmp.eq.s32.totalorder %s25, 1
      %p85 = por %p83, %p84
      %p86 = scmp.ne.s32.totalorder %s77, %s78
      %p87 = scmp.eq.s32.totalorder %s25, 0
      %p88 = por %p86, %p87
      %p89 = scmp.ne.s32.totalorder %s77, %s78
      %p90 = scmp.eq.s32.totalorder %s26, 1
      %p91 = por %p89, %p90
      %p93 = scmp.ne.s32.totalorder %s78, %s92
      %p94 = scmp.eq.s32.totalorder %s26, 0
      %p95 = por %p93, %p94
      %s97 = sadd.s32 %s96, 1
      %p100 = scmp.eq.s32.totalorder %s20, 1
      %p101 = scmp.ne.s32.totalorder %s96, %s98
      %p102 = scmp.eq.s32.totalorder %s20, 0
      %p103 = por %p101, %p102
      %p104 = scmp.ne.s32.totalorder %s96, %s98
      %p105 = scmp.eq.s32.totalorder %s25, 1
      %p106 = por %p104, %p105
      %p107 = scmp.ne.s32.totalorder %s98, %s99
      %p108 = scmp.eq.s32.totalorder %s25, 0
      %p109 = por %p107, %p108
      %p110 = scmp.ne.s32.totalorder %s98, %s99
      %p111 = scmp.eq.s32.totalorder %s26, 1
      %p112 = por %p110, %p111
      %p114 = scmp.ne.s32.totalorder %s99, %s113
      %p115 = scmp.eq.s32.totalorder %s26, 0
      %p116 = por %p114, %p115
      %s118 = sadd.s32 %s117, 1
      %p121 = scmp.eq.s32.totalorder %s20, 1
      %p122 = scmp.ne.s32.totalorder %s117, %s119
      %p123 = scmp.eq.s32.totalorder %s20, 0
      %p124 = por %p122, %p123
      %p125 = scmp.ne.s32.totalorder %s117, %s119
      %p126 = scmp.eq.s32.totalorder %s25, 1
      %p127 = por %p125, %p126
      %p128 = scmp.ne.s32.totalorder %s119, %s120
      %p129 = scmp.eq.s32.totalorder %s25, 0
      %p130 = por %p128, %p129
      %p131 = scmp.ne.s32.totalorder %s119, %s120
      %p132 = scmp.eq.s32.totalorder %s26, 1
      %p133 = por %p131, %p132
      %p135 = scmp.ne.s32.totalorder %s120, %s134
      %p136 = scmp.eq.s32.totalorder %s26, 0
      %p137 = por %p135, %p136
      %s139 = sadd.s32 %s138, 1
      %p142 = scmp.eq.s32.totalorder %s20, 1
      %p143 = scmp.ne.s32.totalorder %s138, %s140
      %p144 = scmp.eq.s32.totalorder %s20, 0
      %p145 = por %p143, %p144
      %p146 = scmp.ne.s32.totalorder %s138, %s140
      %p147 = scmp.eq.s32.totalorder %s25, 1
      %p148 = por %p146, %p147
      %p149 = scmp.ne.s32.totalorder %s140, %s141
      %p150 = scmp.eq.s32.totalorder %s25, 0
      %p151 = por %p149, %p150
      %p152 = scmp.ne.s32.totalorder %s140, %s141
      %p153 = scmp.eq.s32.totalorder %s26, 1
      %p154 = por %p152, %p153
      %p156 = scmp.ne.s32.totalorder %s141, %s155
      %p157 = scmp.eq.s32.totalorder %s26, 0
      %p158 = por %p156, %p157
      %s160 = sadd.s32 %s159, 1
      %p163 = scmp.eq.s32.totalorder %s20, 1
      %p164 = scmp.ne.s32.totalorder %s159, %s161
      %p165 = scmp.eq.s32.totalorder %s20, 0
      %p166 = por %p164, %p165
      %p167 = scmp.ne.s32.totalorder %s159, %s161
      %p168 = scmp.eq.s32.totalorder %s25, 1
      %p169 = por %p167, %p168
      %p170 = scmp.ne.s32.totalorder %s161, %s162
      %p171 = scmp.eq.s32.totalorder %s25, 0
      %p172 = por %p170, %p171
      %p173 = scmp.ne.s32.totalorder %s161, %s162
      %p174 = scmp.eq.s32.totalorder %s26, 1
      %p175 = por %p173, %p174
      %p177 = scmp.ne.s32.totalorder %s162, %s176
      %p178 = scmp.eq.s32.totalorder %s26, 0
      %p179 = por %p177, %p178
      %s180 = ssub.s32 %s20, %s27
      %p181 = scmp.eq.s32.totalorder %s180, 0
      %s183 = sadd.s32 %s182, 1
      %s184 = scalar_select %p181, %s182, %s183
      %p187 = pneg %p181
      %p188 = scmp.eq.s32.totalorder %s20, 1
      %p189 = por %p187, %p188
      %p190 = scmp.ne.s32.totalorder %s182, %s185
      %p191 = scmp.eq.s32.totalorder %s20, 0
      %p192 = por %p190, %p191
      %p193 = scmp.ne.s32.totalorder %s182, %s185
      %p194 = scmp.eq.s32.totalorder %s25, 1
      %p195 = por %p193, %p194
      %p196 = scmp.ne.s32.totalorder %s185, %s186
      %p197 = scmp.eq.s32.totalorder %s25, 0
      %p198 = por %p196, %p197
      %p199 = scmp.ne.s32.totalorder %s185, %s186
      %p200 = scmp.eq.s32.totalorder %s26, 1
      %p201 = por %p199, %p200
      %p203 = scmp.ne.s32.totalorder %s186, %s202
      %p204 = scmp.eq.s32.totalorder %s26, 0
      %p205 = por %p203, %p204
      %p206 = scmp.le.s32.totalorder 1, %s20
      %p207 = scmp.lt.s32.totalorder %s20, 3
      %p208 = pnand %p206, %p207
      %p209 = pneg %p208
      // Predicated region
      $region9: #{tpu_custom_call.1} parent=5 // pred_check
        _
      $region10: #{tpu_custom_call.1} parent=5 // pred_check_branch
        %211 = sbr.rel (%p208) target = $region12
      $region11: #{tpu_custom_call.1} parent=5 // pred_region
        %s212 = ssub.s32 %s20, 1
        // Predicated region
        $region13: #{tpu_custom_call.1} parent=11 // pred_check
          %p213 = pneg %p67
        $region14: #{tpu_custom_call.1} parent=11 // pred_check_branch
          %215 = sbr.rel (%p213) target = $region16
        $region15: #{tpu_custom_call.1} parent=11 // pred_region
          %217 = vsyncadd [#allocation6], 0
          %s218 = sshll.u32 %s1, 4
          %s219 = int_to_ptr.hbm [resolvable:$true] %s218
          %s220 = sshll.u32 [#allocation5], 4
          %s221 = int_to_ptr.vmem [resolvable:$true] %s220
          %226 = dma.hbm_to_vmem [thread:$0]  %s219, 512, %s221, [#allocation6], 128, 128, 8
        $region16: #{tpu_custom_call.1} parent=11 // pred_fallthru
          _
        // Predicated region
        $region17: #{tpu_custom_call.1} parent=11 // pred_check
          %p227 = pneg %p88
        $region18: #{tpu_custom_call.1} parent=11 // pred_check_branch
          %229 = sbr.rel (%p227) target = $region20
        $region19: #{tpu_custom_call.1} parent=11 // pred_region
          _
        $region20: #{tpu_custom_call.1} parent=11 // pred_fallthru
          _
        // Predicated region
        $region21: #{tpu_custom_call.1} parent=11 // pred_check
          %p230 = pneg %p109
        $region22: #{tpu_custom_call.1} parent=11 // pred_check_branch
          %232 = sbr.rel (%p230) target = $region24
        $region23: #{tpu_custom_call.1} parent=11 // pred_region
          %234 = vsyncadd [#allocation6], 0
          %s235 = sshll.u32 %s3, 4
          %s236 = int_to_ptr.hbm [resolvable:$true] %s235
          %s237 = sshll.u32 [#allocation7], 4
          %s238 = int_to_ptr.vmem [resolvable:$true] %s237
          %243 = dma.hbm_to_vmem [thread:$0]  %s236, 512, %s238, [#allocation6], 128, 128, 8
        $region24: #{tpu_custom_call.1} parent=11 // pred_fallthru
          _
        // Predicated region
        $region25: #{tpu_custom_call.1} parent=11 // pred_check
          %p244 = pneg %p130
        $region26: #{tpu_custom_call.1} parent=11 // pred_check_branch
          %246 = sbr.rel (%p244) target = $region28
        $region27: #{tpu_custom_call.1} parent=11 // pred_region
          _
        $region28: #{tpu_custom_call.1} parent=11 // pred_fallthru
          _
        // Predicated region
        $region29: #{tpu_custom_call.1} parent=11 // pred_check
          %p247 = pneg %p151
        $region30: #{tpu_custom_call.1} parent=11 // pred_check_branch
          %249 = sbr.rel (%p247) target = $region32
        $region31: #{tpu_custom_call.1} parent=11 // pred_region
          _
        $region32: #{tpu_custom_call.1} parent=11 // pred_fallthru
          _
        // Predicated region
        $region33: #{tpu_custom_call.1} parent=11 // pred_check
          %p250 = pneg %p172
        $region34: #{tpu_custom_call.1} parent=11 // pred_check_branch
          %252 = sbr.rel (%p250) target = $region36
        $region35: #{tpu_custom_call.1} parent=11 // pred_region
          _
        $region36: #{tpu_custom_call.1} parent=11 // pred_fallthru
          _
      $region12: #{tpu_custom_call.1} parent=5 // pred_fallthru
        _
      %p253 = scmp.lt.s32.totalorder %s20, 2
      // Predicated region
      $region37: #{tpu_custom_call.1} parent=5 // pred_check
        %p254 = pneg %p253
      $region38: #{tpu_custom_call.1} parent=5 // pred_check_branch
        %256 = sbr.rel (%p254) target = $region40
      $region39: #{tpu_custom_call.1} parent=5 // pred_region
        // Predicated region
        $region41: #{tpu_custom_call.1} parent=39 // pred_check
          %p257 = pneg %p40
        $region42: #{tpu_custom_call.1} parent=39 // pred_check_branch
          %259 = sbr.rel (%p257) target = $region44
        $region43: #{tpu_custom_call.1} parent=39 // pred_region
          %s260 = sand.u32 %s30, 1
          %s261 = scalar_lea.sflag [#allocation3], %s260
          %s262 = sand.u32 %s30, 1
          %s263 = smul.addr %s262, 8
          %s264 = scalar_lea.vmem [#allocation2], %s263
          %266 = vsyncadd %s261, 0
          %s267 = smul.addr %s20, 8
          %s268 = scalar_lea.hbm %s0, %s267
          %s270 = sshll.u32 %s268, 4
          %s271 = int_to_ptr.hbm [resolvable:$true] %s270
          %s272 = sshll.u32 %s264, 4
          %s273 = int_to_ptr.vmem [resolvable:$true] %s272
          %275 = dma.hbm_to_vmem [thread:$0]  %s271, 128, %s273, %s261
        $region44: #{tpu_custom_call.1} parent=39 // pred_fallthru
          _
      $region40: #{tpu_custom_call.1} parent=5 // pred_fallthru
        _
      %p276 = scmp.le.s32.totalorder 1, %s20
      %p277 = scmp.lt.s32.totalorder %s20, 3
      %p278 = pnand %p276, %p277
      %p279 = pneg %p278
      // Predicated region
      $region45: #{tpu_custom_call.1} parent=5 // pred_check
        _
      $region46: #{tpu_custom_call.1} parent=5 // pred_check_branch
        %281 = sbr.rel (%p278) target = $region48
      $region47: #{tpu_custom_call.1} parent=5 // pred_region
        %s282 = ssub.s32 %s20, 1
        %s283 = sand.u32 %s33, 1
        %s284 = scalar_lea.sflag [#allocation3], %s283
        %s285 = sand.u32 %s33, 1
        %s286 = smul.addr %s285, 8
        %s287 = scalar_lea.vmem [#allocation2], %s286
        // Predicated region
        $region49: #{tpu_custom_call.1} parent=47 // pred_check
          %p288 = pneg %p46
        $region50: #{tpu_custom_call.1} parent=47 // pred_check_branch
          %290 = sbr.rel (%p288) target = $region52
        $region51: #{tpu_custom_call.1} parent=47 // pred_region
          %292 = dma.done %s284, 128
        $region52: #{tpu_custom_call.1} parent=47 // pred_fallthru
          _
        // Predicated region
        $region53: #{tpu_custom_call.1} parent=47 // pred_check
          %p293 = pneg %p67
        $region54: #{tpu_custom_call.1} parent=47 // pred_check_branch
          %295 = sbr.rel (%p293) target = $region56
        $region55: #{tpu_custom_call.1} parent=47 // pred_region
          %297 = dma.done [#allocation6], 512
        $region56: #{tpu_custom_call.1} parent=47 // pred_fallthru
          _
        // Predicated region
        $region57: #{tpu_custom_call.1} parent=47 // pred_check
          %p298 = pneg %p109
        $region58: #{tpu_custom_call.1} parent=47 // pred_check_branch
          %300 = sbr.rel (%p298) target = $region60
        $region59: #{tpu_custom_call.1} parent=47 // pred_region
          %302 = dma.done [#allocation6], 512
        $region60: #{tpu_custom_call.1} parent=47 // pred_fallthru
          _
        %s303 = sand.u32 %s33, 1
        %s304 = scalar_lea.sflag [#allocation3], %s303
        %s305 = sand.u32 %s33, 1
        %s306 = smul.addr %s305, 8
        %s307 = scalar_lea.vmem [#allocation2], %s306
        %p308 = pneg %p46
        %p309 = pneg %p43
        %p310 = pneg %p67
        %p311 = pneg %p64
        %p312 = pneg %p88
        %p313 = pneg %p85
        %p314 = pneg %p109
        %p315 = pneg %p106
        %p316 = pneg %p130
        %p317 = pneg %p127
        %p318 = pneg %p151
        %p319 = pneg %p148
        %p320 = pneg %p172
        %p321 = pneg %p169
        %p322 = pneg %p198
        %p323 = pneg %p195
        %s324 = sand.u32 %s185, 1
        %s325 = scalar_lea.sflag [#allocation4], %s324
        %s326 = sand.u32 %s185, 1
        %s327 = smul.addr %s326, 8
        %s328 = scalar_lea.vmem [#allocation8], %s327
        %v329 = vld [vmem:[%s287] sm:$0xff]
        %v330 = vld [vmem:[#allocation5] sm:$0xff]
        %v331 = vld [vmem:[#allocation5 + $0x8] sm:$0xff]
        %v332 = vld [vmem:[#allocation5 + $0x10] sm:$0xff]
        %v333 = vld [vmem:[#allocation5 + $0x18] sm:$0xff]
        %v334 = vld [vmem:[%s2] sm:$0x1]
        %v336 = vperm.slane %v334, 0
        %vm338 = vcmask 261120
        %v340 = vsel %vm338, %v329, 0
        %342 = vmatpush.msra.mxu0 0.0
        %343 = vmatpush.msra.mxu0 0.0
        %344 = vmatpush.msra.mxu0 0.0
        %345 = vmatpush.msra.mxu0 0.0
        %346 = vmatpush.msra.mxu0 0.0
        %347 = vmatpush.msra.mxu0 0.0
        %348 = vmatpush.msra.mxu0 0.0
        %349 = vmatpush.msra.mxu0 0.0
        %350 = vmatpush.msra.mxu0 0.0
        %351 = vmatpush.msra.mxu0 0.0
        %352 = vmatpush.msra.mxu0 0.0
        %353 = vmatpush.msra.mxu0 0.0
        %354 = vmatpush.msra.mxu0 %v333
        %355 = vmatpush.msra.mxu0 %v332
        %356 = vmatpush.msra.mxu0 %v331
        %357 = vmatpush.msra.mxu0 %v330
        %358 = vmatmul.f32.gmra.mxu0 %v340
        %v359 = vpop.f32.mrf.mxu0
        %v360 = vadd.f32 %v336, %v359
        %361 = vdwg.mxu0
        %363 = vrot.lane.b32.xlu0 %v360, 120
        %v364 = vpop.permute.xlu0 %363
        %365 = vrot.lane.b32.xlu0 %v360, 112
        %v366 = vpop.permute.xlu0 %365
        %367 = vrot.lane.b32.xlu0 %v360, 104
        %v368 = vpop.permute.xlu0 %367
        %369 = vrot.lane.b32.xlu0 %v360, 96
        %v370 = vpop.permute.xlu0 %369
        %vm371 = vcmask 64512
        %v372 = vsel %vm371, %v360, 0
        %v374 = vsel %vm371, %v370, 0
        %376 = vmatpush.xpose.msra.mxu0 0.0
        %377 = vmatpush.xpose.msra.mxu0 0.0
        %378 = vmatpush.xpose.msra.mxu0 0.0
        %379 = vmatpush.xpose.msra.mxu0 0.0
        %380 = vmatpush.xpose.msra.mxu0 0.0
        %381 = vmatpush.xpose.msra.mxu0 0.0
        %382 = vmatpush.xpose.msra.mxu0 0.0
        %383 = vmatpush.xpose.msra.mxu0 0.0
        %384 = vmatpush.xpose.msra.mxu0 0.0
        %385 = vmatpush.xpose.msra.mxu0 0.0
        %386 = vmatpush.xpose.msra.mxu0 0.0
        %387 = vmatpush.xpose.msra.mxu0 0.0
        %388 = vmatpush.xpose.msra.mxu0 0.0
        %389 = vmatpush.xpose.msra.mxu0 0.0
        %390 = vmatpush.xpose.msra.mxu0 0.0
        %391 = vmatpush.xpose.msra.mxu0 %v374
        %392 = vmatmul.f32.gmra.mxu0 %v372
        %v393 = vpop.f32.mrf.mxu0
        %v394 = vadd.f32 0.0, %v393
        %395 = vdwg.mxu0
        %396 = vrot.lane.b32.xlu0 %v364, 96
        %v397 = vpop.permute.xlu0 %396
        %v398 = vsel %vm371, %v364, 0
        %v400 = vsel %vm371, %v397, 0
        %402 = vmatpush.xpose.msra.mxu0 0.0
        %403 = vmatpush.xpose.msra.mxu0 0.0
        %404 = vmatpush.xpose.msra.mxu0 0.0
        %405 = vmatpush.xpose.msra.mxu0 0.0
        %406 = vmatpush.xpose.msra.mxu0 0.0
        %407 = vmatpush.xpose.msra.mxu0 0.0
        %408 = vmatpush.xpose.msra.mxu0 0.0
        %409 = vmatpush.xpose.msra.mxu0 0.0
        %410 = vmatpush.xpose.msra.mxu0 0.0
        %411 = vmatpush.xpose.msra.mxu0 0.0
        %412 = vmatpush.xpose.msra.mxu0 0.0
        %413 = vmatpush.xpose.msra.mxu0 0.0
        %414 = vmatpush.xpose.msra.mxu0 0.0
        %415 = vmatpush.xpose.msra.mxu0 0.0
        %416 = vmatpush.xpose.msra.mxu0 0.0
        %417 = vmatpush.xpose.msra.mxu0 %v400
        %418 = vmatmul.f32.gmra.mxu0 %v398
        %v419 = vpop.f32.mrf.mxu0
        %v420 = vadd.f32 0.0, %v419
        %421 = vdwg.mxu0
        %422 = vrot.lane.b32.xlu0 %v366, 96
        %v423 = vpop.permute.xlu0 %422
        %v424 = vsel %vm371, %v366, 0
        %v426 = vsel %vm371, %v423, 0
        %428 = vmatpush.xpose.msra.mxu0 0.0
        %429 = vmatpush.xpose.msra.mxu0 0.0
        %430 = vmatpush.xpose.msra.mxu0 0.0
        %431 = vmatpush.xpose.msra.mxu0 0.0
        %432 = vmatpush.xpose.msra.mxu0 0.0
        %433 = vmatpush.xpose.msra.mxu0 0.0
        %434 = vmatpush.xpose.msra.mxu0 0.0
        %435 = vmatpush.xpose.msra.mxu0 0.0
        %436 = vmatpush.xpose.msra.mxu0 0.0
        %437 = vmatpush.xpose.msra.mxu0 0.0
        %438 = vmatpush.xpose.msra.mxu0 0.0
        %439 = vmatpush.xpose.msra.mxu0 0.0
        %440 = vmatpush.xpose.msra.mxu0 0.0
        %441 = vmatpush.xpose.msra.mxu0 0.0
        %442 = vmatpush.xpose.msra.mxu0 0.0
        %443 = vmatpush.xpose.msra.mxu0 %v426
        %444 = vmatmul.f32.gmra.mxu0 %v424
        %v445 = vpop.f32.mrf.mxu0
        %v446 = vadd.f32 0.0, %v445
        %447 = vdwg.mxu0
        %448 = vrot.lane.b32.xlu0 %v368, 96
        %v449 = vpop.permute.xlu0 %448
        %v450 = vsel %vm371, %v368, 0
        %v452 = vsel %vm371, %v449, 0
        %454 = vmatpush.xpose.msra.mxu0 0.0
        %455 = vmatpush.xpose.msra.mxu0 0.0
        %456 = vmatpush.xpose.msra.mxu0 0.0
        %457 = vmatpush.xpose.msra.mxu0 0.0
        %458 = vmatpush.xpose.msra.mxu0 0.0
        %459 = vmatpush.xpose.msra.mxu0 0.0
        %460 = vmatpush.xpose.msra.mxu0 0.0
        %461 = vmatpush.xpose.msra.mxu0 0.0
        %462 = vmatpush.xpose.msra.mxu0 0.0
        %463 = vmatpush.xpose.msra.mxu0 0.0
        %464 = vmatpush.xpose.msra.mxu0 0.0
        %465 = vmatpush.xpose.msra.mxu0 0.0
        %466 = vmatpush.xpose.msra.mxu0 0.0
        %467 = vmatpush.xpose.msra.mxu0 0.0
        %468 = vmatpush.xpose.msra.mxu0 0.0
        %469 = vmatpush.xpose.msra.mxu0 %v452
        %470 = vmatmul.f32.gmra.mxu0 %v450
        %v471 = vpop.f32.mrf.mxu0
        %v472 = vadd.f32 0.0, %v471
        %473 = vdwg.mxu0
        %v474 = vsel %vm371, %v394, -inf
        %475 = vmax.xlane.f32.xlu0 %v474
        %v476 = vpop.xlane.xlu0 %475
        %v477 = vsel %vm371, %v420, -inf
        %478 = vmax.xlane.f32.xlu0 %v477
        %v479 = vpop.xlane.xlu0 %478
        %v480 = vsel %vm371, %v446, -inf
        %481 = vmax.xlane.f32.xlu0 %v480
        %v482 = vpop.xlane.xlu0 %481
        %v483 = vsel %vm371, %v472, -inf
        %484 = vmax.xlane.f32.xlu0 %v483
        %v485 = vpop.xlane.xlu0 %484
        %v486 = vsub.f32 %v394, %v476
        %v487 = vsub.f32 %v420, %v479
        %v488 = vsub.f32 %v446, %v482
        %v489 = vsub.f32 %v472, %v485
        %v490 = vmul.f32 %v486, 1.442695
        %v491 = vpow.pop %v490
        %v492 = vmul.f32 %v487, 1.442695
        %v493 = vpow.pop %v492
        %v494 = vmul.f32 %v488, 1.442695
        %v495 = vpow.pop %v494
        %v496 = vmul.f32 %v489, 1.442695
        %v497 = vpow.pop %v496
        %v498 = vsel %vm371, %v491, 0.0
        %499 = vadd.xlane.f32.xlu0 %v498
        %v500 = vpop.xlane.xlu0 %499
        %v501 = vsel %vm371, %v493, 0.0
        %502 = vadd.xlane.f32.xlu0 %v501
        %v503 = vpop.xlane.xlu0 %502
        %v504 = vsel %vm371, %v495, 0.0
        %505 = vadd.xlane.f32.xlu0 %v504
        %v506 = vpop.xlane.xlu0 %505
        %v507 = vsel %vm371, %v497, 0.0
        %508 = vadd.xlane.f32.xlu0 %v507
        %v509 = vpop.xlane.xlu0 %508
        %510 = vrot.lane.b32.xlu0 %v360, 64
        %v511 = vpop.permute.xlu0 %510
        %v514 = vsel %vm371, %v491, 0
        %516 = vmatpush.msra.mxu0 0.0
        %517 = vmatpush.msra.mxu0 0.0
        %518 = vmatpush.msra.mxu0 0.0
        %519 = vmatpush.msra.mxu0 0.0
        %520 = vmatpush.msra.mxu0 0.0
        %521 = vmatpush.msra.mxu0 0.0
        %522 = vmatpush.msra.mxu0 0.0
        %523 = vmatpush.msra.mxu0 0.0
        %524 = vmatpush.msra.mxu0 0.0
        %525 = vmatpush.msra.mxu0 0.0
        %526 = vmatpush.msra.mxu0 0.0
        %527 = vmatpush.msra.mxu0 0.0
        %528 = vmatpush.msra.mxu0 0.0
        %529 = vmatpush.msra.mxu0 0.0
        %530 = vmatpush.msra.mxu0 0.0
        %531 = vmatpush.msra.mxu0 %v511
        %532 = vmatmul.f32.gmra.mxu0 %v514
        %v533 = vpop.f32.mrf.mxu0
        %v534 = vadd.f32 0.0, %v533
        %535 = vdwg.mxu0
        %536 = vrot.lane.b32.xlu0 %v364, 64
        %v537 = vpop.permute.xlu0 %536
        %v540 = vsel %vm371, %v493, 0
        %542 = vmatpush.msra.mxu0 0.0
        %543 = vmatpush.msra.mxu0 0.0
        %544 = vmatpush.msra.mxu0 0.0
        %545 = vmatpush.msra.mxu0 0.0
        %546 = vmatpush.msra.mxu0 0.0
        %547 = vmatpush.msra.mxu0 0.0
        %548 = vmatpush.msra.mxu0 0.0
        %549 = vmatpush.msra.mxu0 0.0
        %550 = vmatpush.msra.mxu0 0.0
        %551 = vmatpush.msra.mxu0 0.0
        %552 = vmatpush.msra.mxu0 0.0
        %553 = vmatpush.msra.mxu0 0.0
        %554 = vmatpush.msra.mxu0 0.0
        %555 = vmatpush.msra.mxu0 0.0
        %556 = vmatpush.msra.mxu0 0.0
        %557 = vmatpush.msra.mxu0 %v537
        %558 = vmatmul.f32.gmra.mxu0 %v540
        %v559 = vpop.f32.mrf.mxu0
        %v560 = vadd.f32 0.0, %v559
        %561 = vdwg.mxu0
        %562 = vrot.lane.b32.xlu0 %v366, 64
        %v563 = vpop.permute.xlu0 %562
        %v566 = vsel %vm371, %v495, 0
        %568 = vmatpush.msra.mxu0 0.0
        %569 = vmatpush.msra.mxu0 0.0
        %570 = vmatpush.msra.mxu0 0.0
        %571 = vmatpush.msra.mxu0 0.0
        %572 = vmatpush.msra.mxu0 0.0
        %573 = vmatpush.msra.mxu0 0.0
        %574 = vmatpush.msra.mxu0 0.0
        %575 = vmatpush.msra.mxu0 0.0
        %576 = vmatpush.msra.mxu0 0.0
        %577 = vmatpush.msra.mxu0 0.0
        %578 = vmatpush.msra.mxu0 0.0
        %579 = vmatpush.msra.mxu0 0.0
        %580 = vmatpush.msra.mxu0 0.0
        %581 = vmatpush.msra.mxu0 0.0
        %582 = vmatpush.msra.mxu0 0.0
        %583 = vmatpush.msra.mxu0 %v563
        %584 = vmatmul.f32.gmra.mxu0 %v566
        %v585 = vpop.f32.mrf.mxu0
        %v586 = vadd.f32 0.0, %v585
        %587 = vdwg.mxu0
        %588 = vrot.lane.b32.xlu0 %v368, 64
        %v589 = vpop.permute.xlu0 %588
        %v592 = vsel %vm371, %v497, 0
        %594 = vmatpush.msra.mxu0 0.0
        %595 = vmatpush.msra.mxu0 0.0
        %596 = vmatpush.msra.mxu0 0.0
        %597 = vmatpush.msra.mxu0 0.0
        %598 = vmatpush.msra.mxu0 0.0
        %599 = vmatpush.msra.mxu0 0.0
        %600 = vmatpush.msra.mxu0 0.0
        %601 = vmatpush.msra.mxu0 0.0
        %602 = vmatpush.msra.mxu0 0.0
        %603 = vmatpush.msra.mxu0 0.0
        %604 = vmatpush.msra.mxu0 0.0
        %605 = vmatpush.msra.mxu0 0.0
        %606 = vmatpush.msra.mxu0 0.0
        %607 = vmatpush.msra.mxu0 0.0
        %608 = vmatpush.msra.mxu0 0.0
        %609 = vmatpush.msra.mxu0 %v589
        %610 = vmatmul.f32.gmra.mxu0 %v592
        %v611 = vpop.f32.mrf.mxu0
        %v612 = vadd.f32 0.0, %v611
        %613 = vdwg.mxu0
        %v614 = vrcp.pop %v500
        %v615 = vrcp.pop %v503
        %v616 = vrcp.pop %v506
        %v617 = vrcp.pop %v509
        %v618 = vmul.f32 %v534, %v614
        %v619 = vmul.f32 %v560, %v615
        %v620 = vmul.f32 %v586, %v616
        %v621 = vmul.f32 %v612, %v617
        %623 = vrot.lane.b32.xlu0 %v619, 8
        %v624 = vpop.permute.xlu0 %623
        %627 = vrot.lane.b32.xlu0 %v620, 16
        %v628 = vpop.permute.xlu0 %627
        %631 = vrot.lane.b32.xlu0 %v621, 24
        %v632 = vpop.permute.xlu0 %631
        %v634 = vsel %vm371, %v618, %v624
        %vm635 = vcmask 130048
        %v636 = vsel %vm635, %v634, %v628
        %vm637 = vcmask 195584
        %v638 = vsel %vm637, %v636, %v632
        %v639 = vld [vmem:[#allocation7] sm:$0xff]
        %v640 = vld [vmem:[#allocation7 + $0x8] sm:$0xff]
        %v641 = vld [vmem:[#allocation7 + $0x10] sm:$0xff]
        %v642 = vld [vmem:[#allocation7 + $0x18] sm:$0xff]
        %v643 = vld [vmem:[%s4] sm:$0x1]
        %v645 = vperm.slane %v643, 0
        %v648 = vsel %vm338, %v638, 0
        %650 = vmatpush.msra.mxu0 0.0
        %651 = vmatpush.msra.mxu0 0.0
        %652 = vmatpush.msra.mxu0 0.0
        %653 = vmatpush.msra.mxu0 0.0
        %654 = vmatpush.msra.mxu0 0.0
        %655 = vmatpush.msra.mxu0 0.0
        %656 = vmatpush.msra.mxu0 0.0
        %657 = vmatpush.msra.mxu0 0.0
        %658 = vmatpush.msra.mxu0 0.0
        %659 = vmatpush.msra.mxu0 0.0
        %660 = vmatpush.msra.mxu0 0.0
        %661 = vmatpush.msra.mxu0 0.0
        %662 = vmatpush.msra.mxu0 %v642
        %663 = vmatpush.msra.mxu0 %v641
        %664 = vmatpush.msra.mxu0 %v640
        %665 = vmatpush.msra.mxu0 %v639
        %666 = vmatmul.f32.gmra.mxu0 %v648
        %v667 = vpop.f32.mrf.mxu0
        %v668 = vadd.f32 %v645, %v667
        %669 = vdwg.mxu0
        %v670 = vadd.f32 %v668, %v329
        %v671 = vsel %vm338, %v670, 0.0
        %672 = vadd.xlane.f32.xlu0 %v671
        %v673 = vpop.xlane.xlu0 %672
        %v674 = vrcp.pop 32.0
        %v675 = vmul.f32 32.0, %v674
        %v676 = vsub.f32 1.0, %v675
        %v677 = vmul.f32 %v674, %v676
        %v678 = vadd.f32 %v674, %v677
        %vm679 = vweird.f32 %v674
        %v680 = vsel %vm679, %v674, %v678
        %v681 = vmul.f32 %v673, %v680
        %v682 = vsub.f32 %v670, %v681
        %v683 = vmul.f32 %v682, %v682
        %v684 = vsel %vm338, %v683, 0.0
        %685 = vadd.xlane.f32.xlu0 %v684
        %v686 = vpop.xlane.xlu0 %685
        %v687 = vmul.f32 %v686, %v680
        %v688 = vadd.f32 %v687, 1e-12
        %v689 = vrsqrt.pop %v688
        %v690 = vmul.f32 %v689, %v688
        %v691 = vmul.f32 %v690, %v689
        %v692 = vmul.f32 0.5, %v691
        %v693 = vsub.f32 1.5, %v692
        %v694 = vmul.f32 %v689, %v693
        %vm695 = vweird.f32 %v688
        %vm696 = vweird.f32 %v689
        %vm697 = vmor %vm695, %vm696
        %v698 = vsel %vm697, %v689, %v694
        %v699 = vmul.f32 %v682, %v698
        %v700 = vld [vmem:[%s5] sm:$0x1]
        %v702 = vperm.slane %v700, 0
        %v704 = vmul.f32 %v699, %v702
        %v705 = vld [vmem:[%s6] sm:$0x1]
        %v707 = vperm.slane %v705, 0
        %v709 = vadd.f32 %v704, %v707
        %710 = vst.msk [vmem:[%s328] sm:$0xff] %vm338, %v709
        %s711 = sand.u32 %s185, 1
        %s712 = scalar_lea.sflag [#allocation4], %s711
        %s713 = sand.u32 %s185, 1
        %s714 = smul.addr %s713, 8
        %s715 = scalar_lea.vmem [#allocation8], %s714
        // Predicated region
        $region61: #{tpu_custom_call.1} parent=47 // pred_check
          %p716 = pneg %p195
        $region62: #{tpu_custom_call.1} parent=47 // pred_check_branch
          %718 = sbr.rel (%p716) target = $region64
        $region63: #{tpu_custom_call.1} parent=47 // pred_region
          %720 = vsyncadd %s712, 0
          %s721 = smul.addr %s25, 8
          %s722 = scalar_lea.hbm %s7, %s721
          %s724 = sshll.u32 %s715, 4
          %s725 = int_to_ptr.vmem [resolvable:$true] %s724
          %s726 = sshll.u32 %s722, 4
          %s727 = int_to_ptr.hbm [resolvable:$true] %s726
          %729 = dma.vmem_to_hbm [thread:$0]  %s725, 128, %s727, %s712
        $region64: #{tpu_custom_call.1} parent=47 // pred_fallthru
          _
      $region48: #{tpu_custom_call.1} parent=5 // pred_fallthru
        _
      %p730 = scmp.le.s32.totalorder 2, %s20
      // Predicated region
      $region65: #{tpu_custom_call.1} parent=5 // pred_check
        %p731 = pneg %p730
      $region66: #{tpu_custom_call.1} parent=5 // pred_check_branch
        %733 = sbr.rel (%p731) target = $region68
      $region67: #{tpu_custom_call.1} parent=5 // pred_region
        %s734 = ssub.s32 %s20, 2
        // Predicated region
        $region69: #{tpu_custom_call.1} parent=67 // pred_check
          %p735 = pneg %p201
        $region70: #{tpu_custom_call.1} parent=67 // pred_check_branch
          %737 = sbr.rel (%p735) target = $region72
        $region71: #{tpu_custom_call.1} parent=67 // pred_region
          %s738 = sand.u32 %s186, 1
          %s739 = scalar_lea.sflag [#allocation4], %s738
          %s740 = sand.u32 %s186, 1
          %s741 = smul.addr %s740, 8
          %s742 = scalar_lea.vmem [#allocation8], %s741
          %744 = dma.done %s739, 128
        $region72: #{tpu_custom_call.1} parent=67 // pred_fallthru
          _
      $region68: #{tpu_custom_call.1} parent=5 // pred_fallthru
        _
    $region6: #{tpu_custom_call.1} parent=1 // loop_footer
      %s24 = sadd.s32 1, %s20
    $region7: #{tpu_custom_call.1} parent=1 // loop_footer_branch
      %19 = sbr.rel target = $region3
    $region8: #{tpu_custom_call.1} parent=1 // loop_exit
      _
    %745 = vsyncpa [#allocation3], 1
    %s746 = scalar_lea.sflag [#allocation3], 1
    %747 = vsyncpa %s746, 1
    %748 = vsyncpa [#allocation6], 1
    %749 = vsyncpa [#allocation4], 1
    %s750 = scalar_lea.sflag [#allocation4], 1
    %751 = vsyncpa %s750, 1

</llo_original>
